<compile_context>
chip_gen: v5e
topology: v5e:2x2
jax: 0.10.0
libtpu: 0.0.40
codegen_flags: <defaults>
</compile_context>

<pallas_src>
import math

import jax
import jax.numpy as jnp
from jax.experimental import pallas as pl
from jax.experimental.pallas import tpu as pltpu


def _round_up(x, m):
    return (x + m - 1) // m * m


# ----------------------------------------------------------------------------
# Fused kernel: DMA-gather CLS embedding rows from HBM, then
#   h      = gelu(x @ W1 + b1)     (exact erf gelu, like torch default)
#   logits = h @ W2 + b2
# writing a lane-dense [TILE_N, C_pad] logits block.
# ----------------------------------------------------------------------------
def _fused_cls_head_kernel(cls_ids_ref,          # SMEM [N_pad] int32 (scalar prefetch)
                           emb_hbm,              # HBM  [V_pad, H_pad] f32 (pl.ANY)
                           w1_ref, b1_ref,       # VMEM [H_pad,H_pad], [1,H_pad]
                           w2_ref, b2_ref,       # VMEM [H_pad,C_pad], [1,C_pad]
                           o_ref,                # VMEM [TILE_N, C_pad]
                           x_ref,                # VMEM scratch [TILE_N, H_pad]
                           sem):                 # DMA semaphores (TILE_N,)
    tile_n = x_ref.shape[0]
    base = pl.program_id(0) * tile_n

    # Issue all CLS-row gathers first (TILE_N concurrent DMAs), then wait.
    @pl.loop(0, tile_n)
    def _issue(r):
        row = cls_ids_ref[base + r]
        pltpu.make_async_copy(emb_hbm.at[pl.ds(row, 1), :],
                              x_ref.at[pl.ds(r, 1), :],
                              sem.at[r]).start()

    @pl.loop(0, tile_n)
    def _wait(r):
        pltpu.make_async_copy(emb_hbm.at[pl.ds(0, 1), :],
                              x_ref.at[pl.ds(r, 1), :],
                              sem.at[r]).wait()

    x = x_ref[...]                                                   # [TILE_N, H_pad]
    h = jnp.dot(x, w1_ref[...], preferred_element_type=jnp.float32) + b1_ref[...]
    # exact gelu: 0.5 * x * (1 + erf(x / sqrt(2)))  (matches torch F.gelu default)
    inv_sqrt2 = jnp.float32(1.0 / math.sqrt(2.0))
    h = 0.5 * h * (1.0 + jax.lax.erf(h * inv_sqrt2))
    logits = jnp.dot(h, w2_ref[...], preferred_element_type=jnp.float32) + b2_ref[...]
    o_ref[...] = logits.astype(o_ref.dtype)


# ----------------------------------------------------------------------------
# Wrapper: pad to lane-dense shapes, grid over the batch, weights resident.
# ----------------------------------------------------------------------------
def classifier_forward_fused(cls_ids, emb, w1, b1, w2, b2):
    """cls_ids: [N] int32 row indices into emb (attention mask already folded
    in by routing masked rows to the zero embedding row). Returns [N, C]."""
    N = cls_ids.shape[0]
    V, H = emb.shape
    C = w2.shape[1]

    H_pad = _round_up(H, 128)
    C_pad = _round_up(C, 128)
    V_pad = _round_up(V + 1, 8)          # +1 all-zeros row for masked/padded ids
    zero_row = V                          # index of the all-zeros embedding row

    # Batch tiling: sublane-aligned tiles; 256-row tiles for large batches
    # (matches v6e/v7x MXU tile; still a multiple of 128 for v5e).
    tile_n = 256 if N >= 256 else _round_up(N, 8)
    n_pad = _round_up(N, tile_n)

    # Zero-pad operands to lane-dense, (8,128)-aligned shapes.  (In a real
    # deployment the params would be padded once at load time.)
    emb_p = jnp.zeros((V_pad, H_pad), jnp.float32).at[:V, :H].set(emb)
    w1_p = jnp.zeros((H_pad, H_pad), jnp.float32).at[:H, :H].set(w1)
    b1_p = jnp.zeros((1, H_pad), jnp.float32).at[:, :H].set(b1)
    w2_p = jnp.zeros((H_pad, C_pad), jnp.float32).at[:H, :C].set(w2)
    b2_p = jnp.zeros((1, C_pad), jnp.float32).at[:, :C].set(b2)
    ids_p = jnp.full((n_pad,), zero_row, jnp.int32).at[:N].set(
        cls_ids.astype(jnp.int32))

    out_pad = pl.pallas_call(
        _fused_cls_head_kernel,
        out_shape=jax.ShapeDtypeStruct((n_pad, C_pad), jnp.float32),
        grid_spec=pltpu.PrefetchScalarGridSpec(
            num_scalar_prefetch=1,
            grid=(n_pad // tile_n,),
            in_specs=[
                pl.BlockSpec(memory_space=pl.ANY),                    # emb stays in HBM
                pl.BlockSpec((H_pad, H_pad), lambda i, ids: (0, 0)),  # W1 resident
                pl.BlockSpec((1, H_pad), lambda i, ids: (0, 0)),      # b1 resident
                pl.BlockSpec((H_pad, C_pad), lambda i, ids: (0, 0)),  # W2 resident
                pl.BlockSpec((1, C_pad), lambda i, ids: (0, 0)),      # b2 resident
            ],
            out_specs=pl.BlockSpec((tile_n, C_pad), lambda i, ids: (i, 0)),
            scratch_shapes=[
                pltpu.VMEM((tile_n, H_pad), jnp.float32),
                pltpu.SemaphoreType.DMA((tile_n,)),
            ],
        ),
        compiler_params=pltpu.CompilerParams(
            dimension_semantics=("parallel",),
            vmem_limit_bytes=32 * 1024 * 1024,   # also fits v7x's 64 MiB VMEM
        ),
    )(ids_p, emb_p, w1_p, b1_p, w2_p, b2_p)

    return out_pad[:N, :C]


# ----------------------------------------------------------------------------
# Model wrapper mirroring BinaryClassifier_model.forward
# ----------------------------------------------------------------------------
def binary_classifier_forward(batch, params):
    input_vec = batch["input_vec"]       # [N, S] int32 token ids
    input_mask = batch["input_mask"]     # [N, S] {0,1}
    V = params["emb"].shape[0]

    # TODO(synk): the pretrained ElectraModel encoder has no in-script Pallas
    # equivalent; stand-in encoder = embedding lookup masked by attention_mask.
    # Only the CLS position feeds the head, so only the CLS token is embedded
    # (masked rows are routed to the all-zeros embedding row).
    cls_ids = jnp.where(input_mask[:, 0] > 0, input_vec[:, 0], V).astype(jnp.int32)

    logits = classifier_forward_fused(cls_ids, params["emb"],
                                      params["w1"], params["b1"],
                                      params["w2"], params["b2"])
    return {"logits": logits}


# ----------------------------------------------------------------------------
# Deterministic parameter init + example run
# ----------------------------------------------------------------------------
def init_params(key, vocab=100, hidden=32, classes=2):
    k_emb, k_w1, k_b1, k_w2, k_b2 = jax.random.split(key, 5)
    scale1 = 1.0 / math.sqrt(hidden)
    return {
        "emb": jax.random.normal(k_emb, (vocab, hidden), jnp.float32) * 0.02,
        "w1": jax.random.uniform(k_w1, (hidden, hidden), jnp.float32,
                                 -scale1, scale1),
        "b1": jax.random.uniform(k_b1, (1, hidden), jnp.float32,
                                 -scale1, scale1),
        "w2": jax.random.uniform(k_w2, (hidden, classes), jnp.float32,
                                 -scale1, scale1),
        "b2": jax.random.uniform(k_b2, (1, classes), jnp.float32,
                                 -scale1, scale1),
    }


if __name__ == "__main__":
    key = jax.random.PRNGKey(0)
    k_params, k_ids = jax.random.split(key)

    N, S, H, C, V = 2, 8, 32, 2, 100
    params = init_params(k_params, vocab=V, hidden=H, classes=C)

    input_vec = jax.random.randint(k_ids, (N, S), 0, V, dtype=jnp.int32)
    input_mask = jnp.ones((N, S), dtype=jnp.int32)
    batch = {"input_vec": input_vec, "input_mask": input_mask}

    out = binary_classifier_forward(batch, params)
    logits = jax.block_until_ready(out["logits"])

    # pure-JAX reference (same stand-in encoder + exact-erf gelu head)
    cls = params["emb"][input_vec[:, 0]] * input_mask[:, 0, None].astype(jnp.float32)
    h_ref = jax.nn.gelu(cls @ params["w1"] + params["b1"], approximate=False)
    logits_ref = h_ref @ params["w2"] + params["b2"]
    assert logits.shape == (N, C)
    assert jnp.allclose(logits, logits_ref, atol=1e-5, rtol=1e-5)

    print("KERNEL_OK")
</pallas_src>

<mosaic_0001>
module attributes {stable_mosaic.version = 11 : i64} {
  func.func @_fused_cls_head_kernel(%arg0: i32, %arg1: memref<8xi32, #tpu.memory_space<smem>>, %arg2: memref<104x128xf32, #tpu.memory_space<any>>, %arg3: memref<128x128xf32, #tpu.memory_space<vmem>>, %arg4: memref<1x128xf32, #tpu.memory_space<vmem>>, %arg5: memref<128x128xf32, #tpu.memory_space<vmem>>, %arg6: memref<1x128xf32, #tpu.memory_space<vmem>>, %arg7: memref<8x128xf32, #tpu.memory_space<vmem>>, %arg8: memref<8x128xf32, #tpu.memory_space<vmem>>, %arg9: memref<8x!tpu.dma_semaphore, #tpu.memory_space<semaphore_mem>>) attributes {dimension_semantics = [#tpu.dimension_semantics<parallel>], iteration_bounds = array<i64: 1>, scalar_prefetch = 1 : i64, scratch_operands = 2 : i64, tpu.core_type = #tpu.core_type<tc>, window_params = [{}, {pipeline_mode = #tpu.pipeline_mode<synchronous>, transform_indices = @transform_1, window_bounds = array<i64: 128, 128>}, {pipeline_mode = #tpu.pipeline_mode<synchronous>, transform_indices = @transform_2, window_bounds = array<i64: 1, 128>}, {pipeline_mode = #tpu.pipeline_mode<synchronous>, transform_indices = @transform_3, window_bounds = array<i64: 128, 128>}, {pipeline_mode = #tpu.pipeline_mode<synchronous>, transform_indices = @transform_4, window_bounds = array<i64: 1, 128>}, {transform_indices = @transform_5, window_bounds = array<i64: 8, 128>}]} {
    %c8_i32 = arith.constant 8 : i32
    %0 = arith.muli %arg0, %c8_i32 : i32
    %c0_i32 = arith.constant 0 : i32
    %c8_i32_0 = arith.constant 8 : i32
    %1 = arith.addi %c0_i32, %c8_i32_0 : i32
    %c1_i32 = arith.constant 1 : i32
    scf.for %arg10 = %c0_i32 to %1 step %c1_i32  : i32 {
      %c1_i32_21 = arith.constant 1 : i32
      %23 = arith.muli %arg10, %c1_i32_21 : i32
      %c0_i32_22 = arith.constant 0 : i32
      %24 = arith.addi %c0_i32_22, %23 : i32
      %25 = arith.addi %0, %24 : i32
      %26 = arith.index_cast %25 : i32 to index
      %27 = memref.load %arg1[%26] : memref<8xi32, #tpu.memory_space<smem>>
      %c0_i32_23 = arith.constant 0 : i32
      %28 = tpu.memref_slice %arg2[%27, %c0_i32_23] : memref<104x128xf32, #tpu.memory_space<any>> -> memref<1x128xf32, #tpu.memory_space<any>>
      %c0_i32_24 = arith.constant 0 : i32
      %29 = tpu.memref_slice %arg8[%24, %c0_i32_24] : memref<8x128xf32, #tpu.memory_space<vmem>> -> memref<1x128xf32, #tpu.memory_space<vmem>>
      %30 = tpu.memref_slice %arg9[%24] : memref<8x!tpu.dma_semaphore, #tpu.memory_space<semaphore_mem>> -> memref<1x!tpu.dma_semaphore, #tpu.memory_space<semaphore_mem>>
      %31 = tpu.memref_squeeze %30 : memref<1x!tpu.dma_semaphore, #tpu.memory_space<semaphore_mem>> -> memref<!tpu.dma_semaphore, #tpu.memory_space<semaphore_mem>>
      tpu.enqueue_dma source(%28 : memref<1x128xf32, #tpu.memory_space<any>>) target(%29 : memref<1x128xf32, #tpu.memory_space<vmem>>) target_semaphore(%31 : memref<!tpu.dma_semaphore, #tpu.memory_space<semaphore_mem>>)
    }
    %c8_i32_1 = arith.constant 8 : i32
    %c0_i32_2 = arith.constant 0 : i32
    %c8_i32_3 = arith.constant 8 : i32
    %2 = arith.addi %c0_i32_2, %c8_i32_3 : i32
    %c1_i32_4 = arith.constant 1 : i32
    scf.for %arg10 = %c0_i32_2 to %2 step %c1_i32_4  : i32 {
      %c1_i32_21 = arith.constant 1 : i32
      %23 = arith.muli %arg10, %c1_i32_21 : i32
      %c0_i32_22 = arith.constant 0 : i32
      %24 = arith.addi %c0_i32_22, %23 : i32
      %c0_i32_23 = arith.constant 0 : i32
      %c0_i32_24 = arith.constant 0 : i32
      %25 = tpu.memref_slice %arg2[%c0_i32_23, %c0_i32_24] : memref<104x128xf32, #tpu.memory_space<any>> -> memref<1x128xf32, #tpu.memory_space<any>>
      %c0_i32_25 = arith.constant 0 : i32
      %26 = tpu.memref_slice %arg8[%24, %c0_i32_25] : memref<8x128xf32, #tpu.memory_space<vmem>> -> memref<1x128xf32, #tpu.memory_space<vmem>>
      %27 = tpu.memref_slice %arg9[%24] : memref<8x!tpu.dma_semaphore, #tpu.memory_space<semaphore_mem>> -> memref<1x!tpu.dma_semaphore, #tpu.memory_space<semaphore_mem>>
      %28 = tpu.memref_squeeze %27 : memref<1x!tpu.dma_semaphore, #tpu.memory_space<semaphore_mem>> -> memref<!tpu.dma_semaphore, #tpu.memory_space<semaphore_mem>>
      tpu.wait_dma2 semaphore(%28 : memref<!tpu.dma_semaphore, #tpu.memory_space<semaphore_mem>>) src(%25 : memref<1x128xf32, #tpu.memory_space<any>>) dst(%26 : memref<1x128xf32, #tpu.memory_space<vmem>>)
    }
    %c8_i32_5 = arith.constant 8 : i32
    %c0 = arith.constant 0 : index
    %c0_6 = arith.constant 0 : index
    %3 = vector.load %arg8[%c0, %c0_6] : memref<8x128xf32, #tpu.memory_space<vmem>>, vector<8x128xf32>
    %c0_7 = arith.constant 0 : index
    %c0_8 = arith.constant 0 : index
    %4 = vector.load %arg3[%c0_7, %c0_8] : memref<128x128xf32, #tpu.memory_space<vmem>>, vector<128x128xf32>
    %cst = arith.constant dense<0.000000e+00> : vector<8x128xf32>
    %5 = tpu.matmul %3, %4, %cst {dimension_numbers = #tpu.dot_dimension_numbers<[1], [0], [0], [1], [0, 0, 1, 1], [], []>} : vector<8x128xf32>, vector<128x128xf32>, vector<8x128xf32> -> vector<8x128xf32>
    %c0_9 = arith.constant 0 : index
    %c0_10 = arith.constant 0 : index
    %6 = vector.load %arg4[%c0_9, %c0_10] : memref<1x128xf32, #tpu.memory_space<vmem>>, vector<1x128xf32>
    %7 = vector.broadcast %6 : vector<1x128xf32> to vector<8x128xf32>
    %8 = arith.addf %5, %7 : vector<8x128xf32>
    %cst_11 = arith.constant 5.000000e-01 : f32
    %9 = vector.broadcast %cst_11 : f32 to vector<8x128xf32>
    %10 = arith.mulf %9, %8 : vector<8x128xf32>
    %cst_12 = arith.constant 0.707106769 : f32
    %11 = vector.broadcast %cst_12 : f32 to vector<8x128xf32>
    %12 = arith.mulf %8, %11 : vector<8x128xf32>
    %13 = math.erf %12 : vector<8x128xf32>
    %cst_13 = arith.constant 1.000000e+00 : f32
    %14 = vector.broadcast %cst_13 : f32 to vector<8x128xf32>
    %15 = arith.addf %14, %13 : vector<8x128xf32>
    %16 = arith.mulf %10, %15 : vector<8x128xf32>
    %c0_14 = arith.constant 0 : index
    %c0_15 = arith.constant 0 : index
    %17 = vector.load %arg5[%c0_14, %c0_15] : memref<128x128xf32, #tpu.memory_space<vmem>>, vector<128x128xf32>
    %cst_16 = arith.constant dense<0.000000e+00> : vector<8x128xf32>
    %18 = tpu.matmul %16, %17, %cst_16 {dimension_numbers = #tpu.dot_dimension_numbers<[1], [0], [0], [1], [0, 0, 1, 1], [], []>} : vector<8x128xf32>, vector<128x128xf32>, vector<8x128xf32> -> vector<8x128xf32>
    %c0_17 = arith.constant 0 : index
    %c0_18 = arith.constant 0 : index
    %19 = vector.load %arg6[%c0_17, %c0_18] : memref<1x128xf32, #tpu.memory_space<vmem>>, vector<1x128xf32>
    %20 = vector.broadcast %19 : vector<1x128xf32> to vector<8x128xf32>
    %21 = arith.addf %18, %20 : vector<8x128xf32>
    %c0_19 = arith.constant 0 : index
    %c0_20 = arith.constant 0 : index
    %22 = vector.load %arg7[%c0_19, %c0_20] : memref<8x128xf32, #tpu.memory_space<vmem>>, vector<8x128xf32>
    tpu.vector_store %arg7[%c0_19, %c0_20], %21 {strides = array<i32>} : memref<8x128xf32, #tpu.memory_space<vmem>>, vector<8x128xf32>,
    return
  }
  func.func @transform_1(%arg0: i32, %arg1: memref<8xi32, #tpu.memory_space<smem>>) -> (i32, i32) {
    %c0_i32 = arith.constant 0 : i32
    %c0_i32_0 = arith.constant 0 : i32
    %c0_i32_1 = arith.constant 0 : i32
    return %c0_i32, %c0_i32_0 : i32, i32
  }
  func.func @transform_2(%arg0: i32, %arg1: memref<8xi32, #tpu.memory_space<smem>>) -> (i32, i32) {
    %c0_i32 = arith.constant 0 : i32
    %c0_i32_0 = arith.constant 0 : i32
    %c0_i32_1 = arith.constant 0 : i32
    return %c0_i32, %c0_i32_0 : i32, i32
  }
  func.func @transform_3(%arg0: i32, %arg1: memref<8xi32, #tpu.memory_space<smem>>) -> (i32, i32) {
    %c0_i32 = arith.constant 0 : i32
    %c0_i32_0 = arith.constant 0 : i32
    %c0_i32_1 = arith.constant 0 : i32
    return %c0_i32, %c0_i32_0 : i32, i32
  }
  func.func @transform_4(%arg0: i32, %arg1: memref<8xi32, #tpu.memory_space<smem>>) -> (i32, i32) {
    %c0_i32 = arith.constant 0 : i32
    %c0_i32_0 = arith.constant 0 : i32
    %c0_i32_1 = arith.constant 0 : i32
    return %c0_i32, %c0_i32_0 : i32, i32
  }
  func.func @transform_5(%arg0: i32, %arg1: memref<8xi32, #tpu.memory_space<smem>>) -> (i32, i32) {
    %c0_i32 = arith.constant 0 : i32
    %c0_i32_0 = arith.constant 0 : i32
    return %arg0, %c0_i32 : i32, i32
  }
}

</mosaic_0001>

<llo_original>
// kernel: tpu_custom_call.1
$region0: #{tpu_custom_call.1}
  #allocation0 [shape = 'u32[]', space=smem, size = 0x4, offset = 0x4, fixed_abs, tag = 'smem constant byte address 0x4 - core index']
  #allocation1 [shape = 'u32[72,128]{1,0:T(1,128)}', space=vmem, size = 0x9000, scoped, tag = 'internal scratch']
  #allocation2 [shape = 'f32[8,128]{1,0:T(8,128)}', space=vmem, size = 0x1000, scoped, tag = 'scratch operand']
  #allocation3 [shape = 's32[8]{0}', space=sflag, size = 0x20, scoped, tag = 'scratch operand']
  #allocation4 [shape = 's32[1]{0}', space=sflag, size = 0x4, scoped, tag = 'scoped memory for tpu_custom_call.1']
  #allocation5 [shape = 'u8[512]{0}', space=smem, size = 0x200, scoped, tag = 'prefetched SMEM operand 0']
  #allocation12 [shape = 's32[]', space=sflag, size = 0x4, offset = 0, fixed_abs, tag = 'sflag constant byte address 0x0 - dummy sync flag']
  #allocation13 [shape = 's32[]', space=sflag, size = 0x4, offset = 0, fixed_abs, tag = 'sflag constant byte address 0x0 - dummy sync flag']
  #allocation14 [shape = 'u32[]', space=smem, size = 0x4, offset = 0x44, fixed_abs, tag = 'smem constant byte address 0x44 - assertion arg 0']
  #allocation15 [shape = 'u32[]', space=smem, size = 0x4, offset = 0x48, fixed_abs, tag = 'smem constant byte address 0x48 - assertion arg 1']
  %s0 = inlined_call_operand.hbm [shape: s32[8], index: 0, kind: input, shape index: {}]
  %s1 = inlined_call_operand.hbm [shape: f32[104,128], index: 1, kind: input, shape index: {}]
  %s2 = inlined_call_operand.hbm [shape: f32[128,128], index: 2, kind: input, shape index: {}]
  %s3 = inlined_call_operand.vmem [shape: f32[1,128], index: 3, kind: input, shape index: {}]
  %s4 = inlined_call_operand.hbm [shape: f32[128,128], index: 4, kind: input, shape index: {}]
  %s5 = inlined_call_operand.vmem [shape: f32[1,128], index: 5, kind: input, shape index: {}]
  %s6 = inlined_call_operand.hbm [shape: f32[8,128], index: 6, kind: output, shape index: {}]
  %s7 = sld [smem:[#allocation0]]
  $region52: #{tpu_custom_call.1} parent=0
    _
  %s9 = ssub.s32 1, %s7
  %s10 = scalar_select 0, %s9, %s7
  %s12 = sshll.u32 %s0, 4
  %s13 = int_to_ptr.hbm [resolvable:$true] %s12
  %15 = dma.hbm_to_smem %s13, 16, [#allocation5], [#allocation4]
  %17 = dma.done [#allocation4], 16
  %18 = sfence
  $region1: #{tpu_custom_call.1} parent=0
    #allocation6 [shape = 'u8[65536]{0}', space=vmem, size = 0x10000, scoped, tag = 'input window, operand 2, single buffered']
    #allocation7 [shape = 's32[1]{0}', space=sflag, size = 0x4, scoped, tag = 'scoped memory for tpu_custom_call.1']
    #allocation8 [shape = 's32[1]{0}', space=sflag, size = 0x4, scoped, tag = 'scoped memory for tpu_custom_call.1']
    #allocation9 [shape = 'u8[65536]{0}', space=vmem, size = 0x10000, scoped, tag = 'input window, operand 4, single buffered']
    #allocation10 [shape = 's32[1]{0}', space=sflag, size = 0x4, scoped, tag = 'scoped memory for tpu_custom_call.1']
    #allocation11 [shape = 'u8[4096]{0}', space=vmem, size = 0x1000, scoped, tag = 'output window, operand 0, single buffered']
    %19 = vsyncpa [#allocation7], 0
    %20 = vsyncpa [#allocation10], 0
    %21 = vsyncpa [#allocation8], 0
    // Predicated region
    $region2: #{tpu_custom_call.1} parent=1 // pred_check
      _
    $region3: #{tpu_custom_call.1} parent=1 // pred_check_branch
      %23 = sbr.rel (0) target = $region5
    $region4: #{tpu_custom_call.1} parent=1 // pred_region
      %25 = vsyncadd [#allocation7], 0
      %s26 = sshll.u32 %s2, 4
      %s27 = int_to_ptr.hbm [resolvable:$true] %s26
      %s28 = sshll.u32 [#allocation6], 4
      %s29 = int_to_ptr.vmem [resolvable:$true] %s28
      %34 = dma.hbm_to_vmem [thread:$0]  %s27, 2048, %s29, [#allocation7], 128, 128, 8
    $region5: #{tpu_custom_call.1} parent=1 // pred_fallthru
      _
    // Predicated region
    $region6: #{tpu_custom_call.1} parent=1 // pred_check
      _
    $region7: #{tpu_custom_call.1} parent=1 // pred_check_branch
      %36 = sbr.rel (0) target = $region9
    $region8: #{tpu_custom_call.1} parent=1 // pred_region
      _
    $region9: #{tpu_custom_call.1} parent=1 // pred_fallthru
      _
    // Predicated region
    $region10: #{tpu_custom_call.1} parent=1 // pred_check
      _
    $region11: #{tpu_custom_call.1} parent=1 // pred_check_branch
      %38 = sbr.rel (0) target = $region13
    $region12: #{tpu_custom_call.1} parent=1 // pred_region
      %40 = vsyncadd [#allocation10], 0
      %s41 = sshll.u32 %s4, 4
      %s42 = int_to_ptr.hbm [resolvable:$true] %s41
      %s43 = sshll.u32 [#allocation9], 4
      %s44 = int_to_ptr.vmem [resolvable:$true] %s43
      %49 = dma.hbm_to_vmem [thread:$0]  %s42, 2048, %s44, [#allocation10], 128, 128, 8
    $region13: #{tpu_custom_call.1} parent=1 // pred_fallthru
      _
    // Predicated region
    $region14: #{tpu_custom_call.1} parent=1 // pred_check
      _
    $region15: #{tpu_custom_call.1} parent=1 // pred_check_branch
      %51 = sbr.rel (0) target = $region17
    $region16: #{tpu_custom_call.1} parent=1 // pred_region
      _
    $region17: #{tpu_custom_call.1} parent=1 // pred_fallthru
      _
    // Predicated region
    $region18: #{tpu_custom_call.1} parent=1 // pred_check
      _
    $region19: #{tpu_custom_call.1} parent=1 // pred_check_branch
      %53 = sbr.rel (0) target = $region21
    $region20: #{tpu_custom_call.1} parent=1 // pred_region
      %55 = dma.done [#allocation7], 2048
    $region21: #{tpu_custom_call.1} parent=1 // pred_fallthru
      _
    // Predicated region
    $region22: #{tpu_custom_call.1} parent=1 // pred_check
      _
    $region23: #{tpu_custom_call.1} parent=1 // pred_check_branch
      %57 = sbr.rel (0) target = $region25
    $region24: #{tpu_custom_call.1} parent=1 // pred_region
      %59 = dma.done [#allocation10], 2048
    $region25: #{tpu_custom_call.1} parent=1 // pred_fallthru
      _
    %s60 = smul.u32 0, 8
    loop: start=0, step=1, limit=8
    $region26: #{tpu_custom_call.1} parent=1 // loop_pre_header
      _
    $region27: #{tpu_custom_call.1} parent=1 // loop_header
      %s62 = sphi 0, %s66
      %p63 = scmp.ge.s32.totalorder %s62, 8
    $region28: #{tpu_custom_call.1} parent=1 // loop_header_branch
      %65 = sbr.rel (%p63) target = $region32
    $region29: #{tpu_custom_call.1} parent=1 // loop_body
      %s67 = sadd.s32 %s60, %s62
      %s68 = sld [smem:[#allocation5 + %s67]]
      %s69 = scalar_lea.hbm %s1, %s68
      %s70 = scalar_lea.vmem [#allocation2], %s62
      %s71 = scalar_lea.sflag [#allocation3], %s62
      // Predicated region
      $region33: #{tpu_custom_call.1} parent=29 // pred_check
        _
      $region34: #{tpu_custom_call.1} parent=29 // pred_check_branch
        %73 = sbr.rel target = $region36
      $region35: #{tpu_custom_call.1} parent=29 // pred_region
        %74 = sst [smem:[#allocation14]] [#allocation13]
        %75 = sst [smem:[#allocation15]] [#allocation12]
      $region36: #{tpu_custom_call.1} parent=29 // pred_fallthru
        _
      %77 = shalt.err (0)
      %s79 = sshll.u32 %s69, 4
      %s80 = int_to_ptr.hbm [resolvable:$true] %s79
      %s81 = sshll.u32 %s70, 4
      %s82 = int_to_ptr.vmem [resolvable:$true] %s81
      %84 = dma.hbm_to_vmem [thread:$0]  %s80, 16, %s82, %s71
    $region30: #{tpu_custom_call.1} parent=1 // loop_footer
      %s66 = sadd.s32 1, %s62
    $region31: #{tpu_custom_call.1} parent=1 // loop_footer_branch
      %61 = sbr.rel target = $region27
    $region32: #{tpu_custom_call.1} parent=1 // loop_exit
      _
    loop: start=0, step=1, limit=8
    $region37: #{tpu_custom_call.1} parent=1 // loop_pre_header
      _
    $region38: #{tpu_custom_call.1} parent=1 // loop_header
      %s86 = sphi 0, %s90
      %p87 = scmp.ge.s32.totalorder %s86, 8
    $region39: #{tpu_custom_call.1} parent=1 // loop_header_branch
      %89 = sbr.rel (%p87) target = $region43
    $region40: #{tpu_custom_call.1} parent=1 // loop_body
      %s91 = scalar_lea.sflag [#allocation3], %s86
      %s92 = smul.u32 1, 1
      %s93 = sshll.u32 %s92, 4
      %94 = dma.done %s91, %s93
    $region41: #{tpu_custom_call.1} parent=1 // loop_footer
      %s90 = sadd.s32 1, %s86
    $region42: #{tpu_custom_call.1} parent=1 // loop_footer_branch
      %85 = sbr.rel target = $region38
    $region43: #{tpu_custom_call.1} parent=1 // loop_exit
      _
    %v95 = vld [vmem:[#allocation2] sm:$0xff]
    %v96 = vld [vmem:[#allocation6] sm:$0xff]
    %v97 = vld [vmem:[#allocation6 + $0x8] sm:$0xff]
    %v98 = vld [vmem:[#allocation6 + $0x10] sm:$0xff]
    %v99 = vld [vmem:[#allocation6 + $0x18] sm:$0xff]
    %v100 = vld [vmem:[#allocation6 + $0x20] sm:$0xff]
    %v101 = vld [vmem:[#allocation6 + $0x28] sm:$0xff]
    %v102 = vld [vmem:[#allocation6 + $0x30] sm:$0xff]
    %v103 = vld [vmem:[#allocation6 + $0x38] sm:$0xff]
    %v104 = vld [vmem:[#allocation6 + $0x40] sm:$0xff]
    %v105 = vld [vmem:[#allocation6 + $0x48] sm:$0xff]
    %v106 = vld [vmem:[#allocation6 + $0x50] sm:$0xff]
    %v107 = vld [vmem:[#allocation6 + $0x58] sm:$0xff]
    %v108 = vld [vmem:[#allocation6 + $0x60] sm:$0xff]
    %v109 = vld [vmem:[#allocation6 + $0x68] sm:$0xff]
    %v110 = vld [vmem:[#allocation6 + $0x70] sm:$0xff]
    %v111 = vld [vmem:[#allocation6 + $0x78] sm:$0xff]
    %v112 = vld [vmem:[%s3] sm:$0x1]
    %v114 = vperm.slane %v112, 0
    %116 = vmatpush.msra.mxu0 %v111
    %117 = vmatpush.msra.mxu0 %v110
    %118 = vmatpush.msra.mxu0 %v109
    %119 = vmatpush.msra.mxu0 %v108
    %120 = vmatpush.msra.mxu0 %v107
    %121 = vmatpush.msra.mxu0 %v106
    %122 = vmatpush.msra.mxu0 %v105
    %123 = vmatpush.msra.mxu0 %v104
    %124 = vmatpush.msra.mxu0 %v103
    %125 = vmatpush.msra.mxu0 %v102
    %126 = vmatpush.msra.mxu0 %v101
    %127 = vmatpush.msra.mxu0 %v100
    %128 = vmatpush.msra.mxu0 %v99
    %129 = vmatpush.msra.mxu0 %v98
    %130 = vmatpush.msra.mxu0 %v97
    %131 = vmatpush.msra.mxu0 %v96
    %132 = vmatmul.f32.gmra.mxu0 %v95
    %v133 = vpop.f32.mrf.mxu0
    %v134 = vadd.f32 %v114, %v133
    %135 = vdwg.mxu0
    %v136 = vmul.f32 %v134, 0.5
    %v137 = vmul.f32 %v134, 0.70710677
    %v138 = vmul.f32 %v137, %v137
    %v139 = vmin.f32 16.0, %v138
    %v140 = vmul.f32 %v139, 2.1237322e-06
    %v141 = vadd.f32 %v140, 0.00028619796
    %v142 = vmul.f32 %v139, %v141
    %v143 = vadd.f32 %v142, 0.0036580483
    %v144 = vmul.f32 %v139, %v143
    %v145 = vadd.f32 %v144, 0.05243302
    %v146 = vmul.f32 %v139, %v145
    %v147 = vadd.f32 %v146, 0.18741608
    %v148 = vmul.f32 %v139, %v147
    %v149 = vadd.f32 %v148, 1.1283791
    %v150 = vmul.f32 %v137, %v149
    %v151 = vmul.f32 %v139, 3.8918573e-05
    %v152 = vadd.f32 %v151, 0.001143296
    %v153 = vmul.f32 %v139, %v152
    %v154 = vadd.f32 %v153, 0.014752088
    %v155 = vmul.f32 %v139, %v154
    %v156 = vadd.f32 %v155, 0.112945676
    %v157 = vmul.f32 %v139, %v156
    %v158 = vadd.f32 %v157, 0.4994258
    %v159 = vmul.f32 %v139, %v158
    %v160 = vadd.f32 %v159, 1.0
    %v161 = vrcp.pop %v160
    %v162 = vmul.f32 %v160, %v161
    %v163 = vsub.f32 1.0, %v162
    %v164 = vmul.f32 %v161, %v163
    %v165 = vadd.f32 %v161, %v164
    %vm166 = vweird.f32 %v160
    %vm167 = vweird.f32 %v161
    %vm168 = vmor %vm166, %vm167
    %v169 = vsel %vm168, %v161, %v165
    %v170 = vand.u32 2147483647, %v160
    %vm171 = vcmp.eq.f32.partialorder %v170, 8.507059e+37
    %v172 = vand.u32 %v160, 2147483648
    %v173 = vor.u32 1.1754944e-38, %v172
    %v174 = vsel %vm171, %v173, %v169
    %v175 = vmul.f32 %v150, %v174
    %v176 = vmin.f32 %v175, 1.0
    %v177 = vmax.f32 %v176, -1.0
    %v178 = vadd.f32 %v177, 1.0
    %v179 = vmul.f32 %v136, %v178
    %v180 = vld [vmem:[#allocation9] sm:$0xff]
    %v181 = vld [vmem:[#allocation9 + $0x8] sm:$0xff]
    %v182 = vld [vmem:[#allocation9 + $0x10] sm:$0xff]
    %v183 = vld [vmem:[#allocation9 + $0x18] sm:$0xff]
    %v184 = vld [vmem:[#allocation9 + $0x20] sm:$0xff]
    %v185 = vld [vmem:[#allocation9 + $0x28] sm:$0xff]
    %v186 = vld [vmem:[#allocation9 + $0x30] sm:$0xff]
    %v187 = vld [vmem:[#allocation9 + $0x38] sm:$0xff]
    %v188 = vld [vmem:[#allocation9 + $0x40] sm:$0xff]
    %v189 = vld [vmem:[#allocation9 + $0x48] sm:$0xff]
    %v190 = vld [vmem:[#allocation9 + $0x50] sm:$0xff]
    %v191 = vld [vmem:[#allocation9 + $0x58] sm:$0xff]
    %v192 = vld [vmem:[#allocation9 + $0x60] sm:$0xff]
    %v193 = vld [vmem:[#allocation9 + $0x68] sm:$0xff]
    %v194 = vld [vmem:[#allocation9 + $0x70] sm:$0xff]
    %v195 = vld [vmem:[#allocation9 + $0x78] sm:$0xff]
    %v196 = vld [vmem:[%s5] sm:$0x1]
    %v198 = vperm.slane %v196, 0
    %200 = vmatpush.msra.mxu0 %v195
    %201 = vmatpush.msra.mxu0 %v194
    %202 = vmatpush.msra.mxu0 %v193
    %203 = vmatpush.msra.mxu0 %v192
    %204 = vmatpush.msra.mxu0 %v191
    %205 = vmatpush.msra.mxu0 %v190
    %206 = vmatpush.msra.mxu0 %v189
    %207 = vmatpush.msra.mxu0 %v188
    %208 = vmatpush.msra.mxu0 %v187
    %209 = vmatpush.msra.mxu0 %v186
    %210 = vmatpush.msra.mxu0 %v185
    %211 = vmatpush.msra.mxu0 %v184
    %212 = vmatpush.msra.mxu0 %v183
    %213 = vmatpush.msra.mxu0 %v182
    %214 = vmatpush.msra.mxu0 %v181
    %215 = vmatpush.msra.mxu0 %v180
    %216 = vmatmul.f32.gmra.mxu0 %v179
    %v217 = vpop.f32.mrf.mxu0
    %v218 = vadd.f32 %v198, %v217
    %219 = vdwg.mxu0
    %220 = vst [vmem:[#allocation11] sm:$0xff] %v218
    // Predicated region
    $region44: #{tpu_custom_call.1} parent=1 // pred_check
      _
    $region45: #{tpu_custom_call.1} parent=1 // pred_check_branch
      %222 = sbr.rel (0) target = $region47
    $region46: #{tpu_custom_call.1} parent=1 // pred_region
      %224 = vsyncadd [#allocation8], 0
      %s226 = sshll.u32 [#allocation11], 4
      %s227 = int_to_ptr.vmem [resolvable:$true] %s226
      %s228 = sshll.u32 %s6, 4
      %s229 = int_to_ptr.hbm [resolvable:$true] %s228
      %231 = dma.vmem_to_hbm [thread:$0]  %s227, 128, %s229, [#allocation8]
    $region47: #{tpu_custom_call.1} parent=1 // pred_fallthru
      _
    // Predicated region
    $region48: #{tpu_custom_call.1} parent=1 // pred_check
      _
    $region49: #{tpu_custom_call.1} parent=1 // pred_check_branch
      %233 = sbr.rel (0) target = $region51
    $region50: #{tpu_custom_call.1} parent=1 // pred_region
      %235 = dma.done [#allocation8], 128
    $region51: #{tpu_custom_call.1} parent=1 // pred_fallthru
      _
    %236 = vsyncpa [#allocation7], 1
    %237 = vsyncpa [#allocation10], 1
    %238 = vsyncpa [#allocation8], 1
  %239 = vsyncmov [#allocation3]
  %s240 = vpop.sfrf %239
  %p241 = scmp.eq.s32.totalorder %s240, 0
  %p242 = pneg %p241
  %244 = shalt.err (%p242)
  %s245 = scalar_lea.sflag [#allocation3], 1
  %246 = vsyncmov %s245
  %s247 = vpop.sfrf %246
  %p248 = scmp.eq.s32.totalorder %s247, 0
  %p249 = pneg %p248
  %251 = shalt.err (%p249)
  %s252 = scalar_lea.sflag [#allocation3], 2
  %253 = vsyncmov %s252
  %s254 = vpop.sfrf %253
  %p255 = scmp.eq.s32.totalorder %s254, 0
  %p256 = pneg %p255
  %258 = shalt.err (%p256)
  %s259 = scalar_lea.sflag [#allocation3], 3
  %260 = vsyncmov %s259
  %s261 = vpop.sfrf %260
  %p262 = scmp.eq.s32.totalorder %s261, 0
  %p263 = pneg %p262
  %265 = shalt.err (%p263)
  %s266 = scalar_lea.sflag [#allocation3], 4
  %267 = vsyncmov %s266
  %s268 = vpop.sfrf %267
  %p269 = scmp.eq.s32.totalorder %s268, 0
  %p270 = pneg %p269
  %272 = shalt.err (%p270)
  %s273 = scalar_lea.sflag [#allocation3], 5
  %274 = vsyncmov %s273
  %s275 = vpop.sfrf %274
  %p276 = scmp.eq.s32.totalorder %s275, 0
  %p277 = pneg %p276
  %279 = shalt.err (%p277)
  %s280 = scalar_lea.sflag [#allocation3], 6
  %281 = vsyncmov %s280
  %s282 = vpop.sfrf %281
  %p283 = scmp.eq.s32.totalorder %s282, 0
  %p284 = pneg %p283
  %286 = shalt.err (%p284)
  %s287 = scalar_lea.sflag [#allocation3], 7
  %288 = vsyncmov %s287
  %s289 = vpop.sfrf %288
  %p290 = scmp.eq.s32.totalorder %s289, 0
  %p291 = pneg %p290
  %293 = shalt.err (%p291)

</llo_original>
